<compile_context>
chip_gen: v7x
topology: tpu7x:2x2x1
jax: 0.10.0
libtpu: 0.0.40
codegen_flags: <defaults>
</compile_context>

<pallas_src>
import functools

import jax
import jax.numpy as jnp
from jax import lax
from jax.experimental import pallas as pl
from jax.experimental.pallas import tpu as pltpu


def _round_up(x, m):
    return ((x + m - 1) // m) * m


# ============================================================================
# Pallas kernel 1: sliced Wasserstein distance
#   x1, x2 : (B, 3, hw_pad/slab, slab) float32  (lane-dense, slab index on a
#            non-minor axis so the in-kernel slab loop uses plain row indexing)
#   projT  : (P, 3) float32  (transposed, column-normalized projections)
#   out    : mean over (B, HW, P) of (sort_B(x1@proj) - sort_B(x2@proj))**2
# ============================================================================
def _swd_kernel(x1_ref, x2_ref, projT_ref, out_ref, acc_ref, *,
                batch, n_slabs, inv_total):
    k = pl.program_id(1)

    @pl.when(k == 0)
    def _init():
        acc_ref[...] = jnp.zeros_like(acc_ref)

    projT = projT_ref[...]                                   # (P, 3)

    def slab_body(s, carry):
        # (P, 3) @ (3, slab) -> (P, slab) on the MXU, per batch element.
        p1 = [jnp.dot(projT, x1_ref[b, :, s, :],
                      preferred_element_type=jnp.float32) for b in range(batch)]
        p2 = [jnp.dot(projT, x2_ref[b, :, s, :],
                      preferred_element_type=jnp.float32) for b in range(batch)]
        # Fused bubble-sort + rank-wise diff: each pass pushes the max of the
        # remaining elements to slot r and that rank is consumed immediately,
        # so full sorted copies are never materialized (for B=2 this reduces to
        # d_hi = max-max, d_lo = min-min).
        part = None
        for r in range(batch - 1, -1, -1):
            for i in range(r):
                p1[i], p1[i + 1] = (jnp.minimum(p1[i], p1[i + 1]),
                                    jnp.maximum(p1[i], p1[i + 1]))
                p2[i], p2[i + 1] = (jnp.minimum(p2[i], p2[i + 1]),
                                    jnp.maximum(p2[i], p2[i + 1]))
            d = p1[r] - p2[r]
            part = d * d if part is None else part + d * d
        acc_ref[...] += part                                  # (P, slab) VPU adds
        return carry

    lax.fori_loop(0, n_slabs, slab_body, 0, unroll=True)

    @pl.when(k == pl.num_programs(1) - 1)
    def _fin():
        # Single deferred cross-lane reduction; broadcast the scalar over the
        # dense (1, 8, 128) output block (wrapper reads [j, 0, 0]).
        total = jnp.sum(acc_ref[...]) * inv_total
        out_ref[...] = jnp.full(out_ref.shape, total, dtype=out_ref.dtype)


def sliced_wasserstein_distance(x1, x2, rand_proj, *, hw_tile=2048, slab=128):
    """Pallas implementation of slicd_Wasserstein_distance (projections given)."""
    B, C, H, W = x1.shape
    assert C == 3 and rand_proj.shape[0] == 3
    HW = H * W
    P = rand_proj.shape[1]

    x1f = x1.reshape(B, C, HW).astype(jnp.float32)
    x2f = x2.reshape(B, C, HW).astype(jnp.float32)
    projT = rand_proj.T.astype(jnp.float32)                   # (P, 3)

    thw = min(_round_up(hw_tile, slab), _round_up(HW, slab))  # DMA tile (lanes)
    hw_pad = _round_up(HW, thw)
    n_tiles = hw_pad // thw
    if n_tiles % 2:
        # Always even so both v7x TensorCores get work; an all-zero tile that is
        # identical in both inputs sorts identically -> contributes exactly 0.
        n_tiles += 1
        hw_pad += thw
    if hw_pad != HW:
        pad = ((0, 0), (0, 0), (0, hw_pad - HW))
        x1f = jnp.pad(x1f, pad)
        x2f = jnp.pad(x2f, pad)

    n_par, n_seq = 2, n_tiles // 2
    n_slabs = thw // slab

    # Put the slab index on a non-minor axis (free, contiguous reshape).
    x1f = x1f.reshape(B, C, hw_pad // slab, slab)
    x2f = x2f.reshape(B, C, hw_pad // slab, slab)

    inv_total = 1.0 / float(B * HW * P)   # divide by the TRUE size, not padded
    kernel = functools.partial(_swd_kernel, batch=B, n_slabs=n_slabs,
                               inv_total=inv_total)

    flops = 4 * B * hw_pad * 3 * P + 2 * B * B * P * hw_pad + 3 * B * P * hw_pad
    bytes_accessed = 2 * B * 3 * hw_pad * 4 + P * 3 * 4 + n_par * 8 * 128 * 4

    partials = pl.pallas_call(
        kernel,
        out_shape=jax.ShapeDtypeStruct((n_par, 8, 128), jnp.float32),
        grid_spec=pltpu.PrefetchScalarGridSpec(
            num_scalar_prefetch=0,
            grid=(n_par, n_seq),
            in_specs=[
                pl.BlockSpec((B, C, n_slabs, slab),
                             lambda j, k: (0, 0, j * n_seq + k, 0)),
                pl.BlockSpec((B, C, n_slabs, slab),
                             lambda j, k: (0, 0, j * n_seq + k, 0)),
                pl.BlockSpec((P, C), lambda j, k: (0, 0)),
            ],
            out_specs=pl.BlockSpec((1, 8, 128), lambda j, k: (j, 0, 0)),
            scratch_shapes=[pltpu.VMEM((P, slab), jnp.float32)],
        ),
        compiler_params=pltpu.CompilerParams(
            dimension_semantics=("parallel", "arbitrary"),
            vmem_limit_bytes=32 * 1024 * 1024),
        cost_estimate=pl.CostEstimate(
            flops=int(flops), transcendentals=0,
            bytes_accessed=int(bytes_accessed)),
    )(x1f, x2f, projT)
    return jnp.sum(partials[:, 0, 0]).reshape(1)   # matches torch.zeros(1) shape


# ============================================================================
# Pallas kernel 2: fused pixel-wise affine + nearest x`up` H-upsample of shift
#   x grouped along lanes as (BC, th, up*W):  element (i, k, r*W + w) is the
#   full-res pixel (i, k*up + r, w);  shift is (BC, th, W) (already W-upsampled
#   at 1/up height); scale is a per-(B,C) SMEM scalar.
#   out[i, k, r*W + w] = scale[i] * x[i, k, r*W + w] + shift[i, k, w]
# ============================================================================
def _affine_kernel(scale_ref, x_ref, shift_ref, o_ref, *, up, w):
    i = pl.program_id(0)
    sc = scale_ref[i]                         # per-(b, c) scalar from SMEM
    sh = shift_ref[0].astype(jnp.float32)     # (hb, W): one low-res row / up rows
    for r in range(up):                       # nearest H-upsample: reuse sh
        xs = x_ref[0, :, r * w:(r + 1) * w].astype(jnp.float32)
        o_ref[0, :, r * w:(r + 1) * w] = (sc * xs + sh).astype(o_ref.dtype)


def _affine_vmem_params():
    """(per-block byte budget, scoped VMEM limit) — generation aware."""
    try:
        vmem_cap = int(getattr(pltpu.get_tpu_info(), "vmem_capacity_bytes",
                               64 * 1024 * 1024))
    except Exception:
        vmem_cap = 64 * 1024 * 1024
    if vmem_cap >= 100 * 1024 * 1024:              # v5e / v6e: 128 MiB physical
        return 6 * 1024 * 1024, 64 * 1024 * 1024
    return 2 * 1024 * 1024, 32 * 1024 * 1024       # v7x: 64 MiB physical


def _pick_row_tile(th, up, W, itemsize, budget):
    if th <= 8:
        return th
    rows = max(8, budget // max(1, itemsize * up * W))
    divs8 = [t for t in range(8, th + 1, 8) if th % t == 0]
    under = [t for t in divs8 if t <= rows]
    if under:
        return max(under)
    if divs8:
        return min(divs8)
    return th


def fused_affine_nearest(x, scale_bc, shift_low, *, up=4):
    """out = nearest_up(scale) * x + nearest_up(shift); scale is (B, C) constant."""
    B, C, H, W = x.shape
    if (H % up) or (W % up) or shift_low.shape != (B, C, H // up, W // up):
        # TODO(synk): ragged spatial sizes fall back to plain XLA (nearest resize).
        shift_full = jax.image.resize(shift_low.astype(jnp.float32),
                                      (B, C, H, W), method="nearest")
        out = (scale_bc[:, :, None, None].astype(jnp.float32)
               * x.astype(jnp.float32) + shift_full)
        return out.astype(x.dtype)

    th = H // up
    BC = B * C

    # Pre-expand the low-res shift along W only (1/up-size data in XLA); the H
    # expansion is fused into the kernel.  x / out stay in the model dtype.
    # TODO(synk): the W-upsample could also be fused in-kernel (lane repeat) once
    # that lowering is verified to stay vectorized on all TPU generations.
    shift_w = jnp.repeat(shift_low, up, axis=-1).reshape(BC, th, W)
    scale_flat = scale_bc.reshape(BC).astype(jnp.float32)
    xg = x.reshape(BC, th, up * W)            # lane-grouped rows (free reshape)

    budget, vmem_limit = _affine_vmem_params()
    hb = _pick_row_tile(th, up, W, x.dtype.itemsize, budget)
    grid = (BC, th // hb)

    kernel = functools.partial(_affine_kernel, up=up, w=W)
    out = pl.pallas_call(
        kernel,
        out_shape=jax.ShapeDtypeStruct((BC, th, up * W), x.dtype),
        grid_spec=pltpu.PrefetchScalarGridSpec(
            num_scalar_prefetch=1,            # scale -> SMEM scalars
            grid=grid,
            in_specs=[
                pl.BlockSpec((1, hb, up * W), lambda i, h, sc: (i, h, 0)),
                pl.BlockSpec((1, hb, W), lambda i, h, sc: (i, h, 0)),
            ],
            out_specs=pl.BlockSpec((1, hb, up * W), lambda i, h, sc: (i, h, 0)),
        ),
        compiler_params=pltpu.CompilerParams(
            dimension_semantics=("parallel", "parallel"),
            vmem_limit_bytes=vmem_limit),
    )(scale_flat, xg, shift_w)
    return out.reshape(B, C, H, W)


# ============================================================================
# Synthetic deterministic stand-in for the external c_aug module.
# ============================================================================
class SyntheticChannelAug:
    """Produces (scale, shift) from noise + down-scaled target.

    scale is per-(B, C) (spatially constant), shift is at the downsampled
    resolution; the nearest x4 upsample back to full resolution is fused into
    the Pallas transform kernel (numerically equivalent to resizing first).
    """

    def __init__(self, key, c=3, noise_dim=128, up=4):
        k1, k2, k3 = jax.random.split(key, 3)
        self.w_scale = 0.05 * jax.random.normal(k1, (noise_dim, c), jnp.float32)
        self.w_shift = 0.05 * jax.random.normal(k2, (noise_dim, c), jnp.float32)
        self.w_prob = 0.05 * jax.random.normal(k3, (noise_dim, 1), jnp.float32)
        self.up = up

    def __call__(self, target, noise, condition, update):
        # target: (B, C, th, tw) downsampled image; noise: (B, 128)
        scale = 1.0 + jnp.tanh(noise @ self.w_scale)                     # (B, C)
        shift = jnp.tanh(noise @ self.w_shift)[:, :, None, None] \
            + 0.1 * jnp.tanh(target)                                     # (B, C, th, tw)
        c_prob = jax.nn.sigmoid(noise @ self.w_prob)[:, 0]
        return scale, shift, c_prob

    def transform(self, x, scale, shift):
        return fused_affine_nearest(x, scale, shift, up=self.up)


# ============================================================================
# AugmentationContainer (JAX port of the PyTorch module's forward semantics)
# ============================================================================
class AugmentationContainer:
    def __init__(self, c_aug=None, g_aug=None, t_aug=None, c_reg_coef=0.0,
                 f_dim=512, n_projection=128, rng_key=None):
        self.c_aug = c_aug
        self.g_aug = g_aug
        self.t_aug = t_aug
        self.c_reg_coef = c_reg_coef
        self.scale_factor = 0.25
        self.f_dim = f_dim
        self.n_projection = n_projection
        self._key = jax.random.PRNGKey(0) if rng_key is None else rng_key

    def _next_key(self):
        self._key, sub = jax.random.split(self._key)
        return sub

    def get_params(self, x, c, c_aug, g_aug, t_aug, update):
        B, C, H, W = x.shape
        grid = scale = shift = g_prob = c_prob = p_strategy = m_strategy = None
        noise = jax.random.normal(self._next_key(), (B, 128), jnp.float32)
        target = x
        condition = c
        th, tw = int(H * self.scale_factor), int(W * self.scale_factor)
        target = jax.image.resize(target, (B, C, th, tw), method="bilinear")
        # TODO(synk): f_dim==19 nearest resize of the semantic condition map is
        # skipped (condition is None in this synthetic setup).
        if g_aug is not None:
            grid, g_prob = g_aug(x, noise, c, update)
        if c_aug is not None:
            scale, shift, c_prob = c_aug(target, noise, condition, update)
            # NOTE: the nearest x4 upsample of (scale, shift) back to (H, W) is
            # fused into the Pallas transform kernel instead of being
            # materialized here (numerically identical, saves HBM round trips).
        if t_aug is not None:
            p_strategy, m_strategy = t_aug(noise, condition)
        return (scale, shift), grid, g_prob, c_prob, p_strategy, m_strategy

    def _swd(self, x1, x2):
        proj = jax.random.normal(self._next_key(), (3, self.n_projection),
                                 jnp.float32)
        proj = proj / (jnp.linalg.norm(proj, ord=2, axis=0, keepdims=True) + 1e-12)
        return sliced_wasserstein_distance(x1, x2, proj)

    def augmentation(self, x, x_t, condition, means, stds, c_aug, g_aug, t_aug,
                     pw=None, update=False, for_mask=False):
        g_prob = c_prob = p_strategy = m_strategy = None
        # (for_mask path of the original module is documented as unused)
        c_param, g_param, g_prob, c_prob, p_strategy, m_strategy = \
            self.get_params(x, condition, c_aug, g_aug, t_aug, update)
        aug_x, aug_x_t = x, x_t
        swd = jnp.zeros((1,), jnp.float32)
        if t_aug is not None:
            aug_x, aug_x_t, pw = t_aug.transform(
                x, x_t, means, stds, p_strategy, m_strategy, pw)
            if update and self.c_reg_coef > 0:
                swd = self.c_reg_coef * self._swd(x, aug_x)
        else:
            if c_aug is not None:
                aug_x = c_aug.transform(x, *c_param)
                if update and self.c_reg_coef > 0:
                    swd = self.c_reg_coef * self._swd(x, aug_x)
            if g_aug is not None and (not for_mask):
                aug_x, aug_x_t, pw = g_aug.transform(aug_x, x_t, g_param, pw)
        return aug_x, aug_x_t, swd, g_prob, c_prob, pw, p_strategy, m_strategy

    def forward(self, x, x_t, condition, means, stds, pw=None, update=False,
                for_mask=False):
        (x, x_t, swd, g_prob, c_prob, pw,
         p_strategy, m_strategy) = self.augmentation(
            x, x_t, condition, means, stds, self.c_aug, self.g_aug, self.t_aug,
            pw, update=update, for_mask=for_mask)
        return x, x_t, swd, g_prob, c_prob, pw, p_strategy, m_strategy

    __call__ = forward


if __name__ == "__main__":
    key = jax.random.PRNGKey(0)
    kx, kxt, kaug, kcont, kproj = jax.random.split(key, 5)

    B, C, H, W = 2, 3, 16, 16
    x = jax.random.uniform(kx, (B, C, H, W), jnp.float32)
    x_t = jax.random.uniform(kxt, (B, C, H, W), jnp.float32)
    means = jnp.array([0.485, 0.456, 0.406], jnp.float32)
    stds = jnp.array([0.229, 0.224, 0.225], jnp.float32)

    c_aug = SyntheticChannelAug(kaug, c=C, noise_dim=128)
    container = AugmentationContainer(c_aug=c_aug, c_reg_coef=1.0, f_dim=512,
                                      n_projection=128, rng_key=kcont)

    aug_x, aug_x_t, swd, g_prob, c_prob, pw, p_s, m_s = container(
        x, x_t, None, means, stds, pw=None, update=True, for_mask=False)
    jax.block_until_ready((aug_x, aug_x_t, swd))

    assert aug_x.shape == x.shape
    assert aug_x_t.shape == x_t.shape
    assert swd.shape == (1,)
    assert bool(jnp.isfinite(swd).all())

    # --- lightweight correctness cross-checks against pure-JAX references ---
    # SWD kernel
    proj = jax.random.normal(kproj, (3, 128), jnp.float32)
    proj = proj / (jnp.linalg.norm(proj, ord=2, axis=0, keepdims=True) + 1e-12)
    swd_k = sliced_wasserstein_distance(x, aug_x, proj)
    a = jnp.transpose(x.reshape(B, C, H * W), (0, 2, 1)) @ proj
    b = jnp.transpose(aug_x.reshape(B, C, H * W), (0, 2, 1)) @ proj
    swd_ref = jnp.mean((jnp.sort(a, axis=0) - jnp.sort(b, axis=0)) ** 2)
    assert bool(jnp.allclose(swd_k[0], swd_ref, rtol=1e-3, atol=1e-3))

    # Fused affine + nearest-upsample kernel
    noise_chk = jax.random.normal(jax.random.PRNGKey(7), (B, 128), jnp.float32)
    tgt = jax.image.resize(x, (B, C, H // 4, W // 4), method="bilinear")
    sc, sh, _ = c_aug(tgt, noise_chk, None, True)
    out_k = fused_affine_nearest(x, sc, sh, up=4)
    sh_full = jnp.repeat(jnp.repeat(sh, 4, axis=-2), 4, axis=-1)
    out_ref = sc[:, :, None, None] * x + sh_full
    assert bool(jnp.allclose(out_k, out_ref, rtol=1e-4, atol=1e-4))

    print("KERNEL_OK")
</pallas_src>

<mosaic_0001>
module attributes {stable_mosaic.version = 11 : i64} {
  func.func @_affine_kernel(%arg0: i32, %arg1: i32, %arg2: memref<6xf32, #tpu.memory_space<smem>>, %arg3: memref<1x4x64xf32, #tpu.memory_space<vmem>>, %arg4: memref<1x4x16xf32, #tpu.memory_space<vmem>>, %arg5: memref<1x4x64xf32, #tpu.memory_space<vmem>>) attributes {dimension_semantics = [#tpu.dimension_semantics<parallel>, #tpu.dimension_semantics<parallel>], iteration_bounds = array<i64: 6, 1>, scalar_prefetch = 1 : i64, scratch_operands = 0 : i64, tpu.core_type = #tpu.core_type<tc>, window_params = [{transform_indices = @transform_0, window_bounds = array<i64: 1, 4, 64>}, {transform_indices = @transform_1, window_bounds = array<i64: 1, 4, 16>}, {transform_indices = @transform_2, window_bounds = array<i64: 1, 4, 64>}]} {
    %0 = arith.index_cast %arg0 : i32 to index
    %1 = memref.load %arg2[%0] : memref<6xf32, #tpu.memory_space<smem>>
    %c0 = arith.constant 0 : index
    %c0_0 = arith.constant 0 : index
    %c0_1 = arith.constant 0 : index
    %2 = vector.load %arg4[%c0, %c0_0, %c0_1] : memref<1x4x16xf32, #tpu.memory_space<vmem>>, vector<1x4x16xf32>
    %3 = vector.shape_cast %2 : vector<1x4x16xf32> to vector<4x16xf32>
    %c0_2 = arith.constant 0 : index
    %c0_3 = arith.constant 0 : index
    %c0_4 = arith.constant 0 : index
    %4 = vector.load %arg3[%c0_2, %c0_3, %c0_4] : memref<1x4x64xf32, #tpu.memory_space<vmem>>, vector<1x4x16xf32>
    %5 = vector.shape_cast %4 : vector<1x4x16xf32> to vector<4x16xf32>
    %6 = vector.broadcast %1 : f32 to vector<4x16xf32>
    %7 = arith.mulf %6, %5 : vector<4x16xf32>
    %8 = arith.addf %7, %3 : vector<4x16xf32>
    %c0_5 = arith.constant 0 : index
    %c0_6 = arith.constant 0 : index
    %c0_7 = arith.constant 0 : index
    %9 = vector.load %arg5[%c0_5, %c0_6, %c0_7] : memref<1x4x64xf32, #tpu.memory_space<vmem>>, vector<1x4x16xf32>
    %10 = vector.shape_cast %9 : vector<1x4x16xf32> to vector<4x16xf32>
    %11 = vector.shape_cast %8 : vector<4x16xf32> to vector<1x4x16xf32>
    tpu.vector_store %arg5[%c0_5, %c0_6, %c0_7], %11 {strides = array<i32>} : memref<1x4x64xf32, #tpu.memory_space<vmem>>, vector<1x4x16xf32>,
    %c0_8 = arith.constant 0 : index
    %c0_9 = arith.constant 0 : index
    %c16 = arith.constant 16 : index
    %12 = vector.load %arg3[%c0_8, %c0_9, %c16] : memref<1x4x64xf32, #tpu.memory_space<vmem>>, vector<1x4x16xf32>
    %13 = vector.shape_cast %12 : vector<1x4x16xf32> to vector<4x16xf32>
    %14 = vector.broadcast %1 : f32 to vector<4x16xf32>
    %15 = arith.mulf %14, %13 : vector<4x16xf32>
    %16 = arith.addf %15, %3 : vector<4x16xf32>
    %c0_10 = arith.constant 0 : index
    %c0_11 = arith.constant 0 : index
    %c16_12 = arith.constant 16 : index
    %17 = vector.load %arg5[%c0_10, %c0_11, %c16_12] : memref<1x4x64xf32, #tpu.memory_space<vmem>>, vector<1x4x16xf32>
    %18 = vector.shape_cast %17 : vector<1x4x16xf32> to vector<4x16xf32>
    %19 = vector.shape_cast %16 : vector<4x16xf32> to vector<1x4x16xf32>
    tpu.vector_store %arg5[%c0_10, %c0_11, %c16_12], %19 {strides = array<i32>} : memref<1x4x64xf32, #tpu.memory_space<vmem>>, vector<1x4x16xf32>,
    %c0_13 = arith.constant 0 : index
    %c0_14 = arith.constant 0 : index
    %c32 = arith.constant 32 : index
    %20 = vector.load %arg3[%c0_13, %c0_14, %c32] : memref<1x4x64xf32, #tpu.memory_space<vmem>>, vector<1x4x16xf32>
    %21 = vector.shape_cast %20 : vector<1x4x16xf32> to vector<4x16xf32>
    %22 = vector.broadcast %1 : f32 to vector<4x16xf32>
    %23 = arith.mulf %22, %21 : vector<4x16xf32>
    %24 = arith.addf %23, %3 : vector<4x16xf32>
    %c0_15 = arith.constant 0 : index
    %c0_16 = arith.constant 0 : index
    %c32_17 = arith.constant 32 : index
    %25 = vector.load %arg5[%c0_15, %c0_16, %c32_17] : memref<1x4x64xf32, #tpu.memory_space<vmem>>, vector<1x4x16xf32>
    %26 = vector.shape_cast %25 : vector<1x4x16xf32> to vector<4x16xf32>
    %27 = vector.shape_cast %24 : vector<4x16xf32> to vector<1x4x16xf32>
    tpu.vector_store %arg5[%c0_15, %c0_16, %c32_17], %27 {strides = array<i32>} : memref<1x4x64xf32, #tpu.memory_space<vmem>>, vector<1x4x16xf32>,
    %c0_18 = arith.constant 0 : index
    %c0_19 = arith.constant 0 : index
    %c48 = arith.constant 48 : index
    %28 = vector.load %arg3[%c0_18, %c0_19, %c48] : memref<1x4x64xf32, #tpu.memory_space<vmem>>, vector<1x4x16xf32>
    %29 = vector.shape_cast %28 : vector<1x4x16xf32> to vector<4x16xf32>
    %30 = vector.broadcast %1 : f32 to vector<4x16xf32>
    %31 = arith.mulf %30, %29 : vector<4x16xf32>
    %32 = arith.addf %31, %3 : vector<4x16xf32>
    %c0_20 = arith.constant 0 : index
    %c0_21 = arith.constant 0 : index
    %c48_22 = arith.constant 48 : index
    %33 = vector.load %arg5[%c0_20, %c0_21, %c48_22] : memref<1x4x64xf32, #tpu.memory_space<vmem>>, vector<1x4x16xf32>
    %34 = vector.shape_cast %33 : vector<1x4x16xf32> to vector<4x16xf32>
    %35 = vector.shape_cast %32 : vector<4x16xf32> to vector<1x4x16xf32>
    tpu.vector_store %arg5[%c0_20, %c0_21, %c48_22], %35 {strides = array<i32>} : memref<1x4x64xf32, #tpu.memory_space<vmem>>, vector<1x4x16xf32>,
    return
  }
  func.func @transform_0(%arg0: i32, %arg1: i32, %arg2: memref<6xf32, #tpu.memory_space<smem>>) -> (i32, i32, i32) {
    %c0_i32 = arith.constant 0 : i32
    %c0_i32_0 = arith.constant 0 : i32
    return %arg0, %arg1, %c0_i32 : i32, i32, i32
  }
  func.func @transform_1(%arg0: i32, %arg1: i32, %arg2: memref<6xf32, #tpu.memory_space<smem>>) -> (i32, i32, i32) {
    %c0_i32 = arith.constant 0 : i32
    %c0_i32_0 = arith.constant 0 : i32
    return %arg0, %arg1, %c0_i32 : i32, i32, i32
  }
  func.func @transform_2(%arg0: i32, %arg1: i32, %arg2: memref<6xf32, #tpu.memory_space<smem>>) -> (i32, i32, i32) {
    %c0_i32 = arith.constant 0 : i32
    %c0_i32_0 = arith.constant 0 : i32
    return %arg0, %arg1, %c0_i32 : i32, i32, i32
  }
}

</mosaic_0001>

<llo_original>
// kernel: tpu_custom_call.1
$region0: #{tpu_custom_call.1}
  #allocation0 [shape = 'u32[]', space=smem, size = 0x4, offset = 0x4, fixed_abs, tag = 'smem constant byte address 0x4 - core index']
  #allocation1 [shape = 'u32[144,128]{1,0:T(1,128)}', space=vmem, size = 0x12000, scoped, tag = 'internal scratch']
  #allocation2 [shape = 's32[1]{0}', space=sflag, size = 0x4, scoped, tag = 'scoped memory for tpu_custom_call.1']
  #allocation3 [shape = 'u8[512]{0}', space=smem, size = 0x200, scoped, tag = 'prefetched SMEM operand 0']
  %s0 = inlined_call_operand.hbm [shape: f32[6], index: 0, kind: input, shape index: {}]
  %s1 = inlined_call_operand.hbm [shape: f32[6,4,64], index: 1, kind: input, shape index: {}]
  %s2 = inlined_call_operand.hbm [shape: f32[6,4,16], index: 2, kind: input, shape index: {}]
  %s3 = inlined_call_operand.hbm [shape: f32[6,4,64], index: 3, kind: output, shape index: {}]
  %s4 = sld [smem:[#allocation0]]
  $region49: #{tpu_custom_call.1} parent=0
    _
  %s6 = ssub.s32 1, %s4
  %s7 = scalar_select 0, %s6, %s4
  %9 = dma.hbm_to_smem %s0, 16, [#allocation3], [#allocation2]
  %10 = dma.done [#allocation2], 16
  %11 = sfence
  $region1: #{tpu_custom_call.1} parent=0
    #allocation4 [shape = 'u8[4096]{0}', space=vmem, size = 0x1000, scoped, tag = 'input window, operand 1']
    #allocation5 [shape = 's32[2]{0}', space=sflag, size = 0x8, scoped, tag = 'scoped memory for tpu_custom_call.1']
    #allocation6 [shape = 's32[2]{0}', space=sflag, size = 0x8, scoped, tag = 'scoped memory for tpu_custom_call.1']
    #allocation7 [shape = 'u8[4096]{0}', space=vmem, size = 0x1000, scoped, tag = 'input window, operand 2']
    #allocation8 [shape = 's32[2]{0}', space=sflag, size = 0x8, scoped, tag = 'scoped memory for tpu_custom_call.1']
    #allocation9 [shape = 'u8[4096]{0}', space=vmem, size = 0x1000, scoped, tag = 'output window, operand 0']
    %12 = vsyncpa [#allocation5], 0
    %s13 = scalar_lea.sflag [#allocation5], 1
    %14 = vsyncpa %s13, 0
    %15 = vsyncpa [#allocation8], 0
    %s16 = scalar_lea.sflag [#allocation8], 1
    %17 = vsyncpa %s16, 0
    %18 = vsyncpa [#allocation6], 0
    %s19 = scalar_lea.sflag [#allocation6], 1
    %20 = vsyncpa %s19, 0
    loop: start=0, step=1, limit=8
    $region2: #{tpu_custom_call.1} parent=1 // loop_pre_header
      _
    $region3: #{tpu_custom_call.1} parent=1 // loop_header
      %s22 = sphi 0, %s26
      %p23 = scmp.ge.s32.totalorder %s22, 8
      %s29 = sphi 0, %s41
      %s30 = sphi 0, %s37
      %s31 = sphi 0, %s29
      %s32 = sphi 0, %s30
      %s33 = sphi 0, %s31
      %s34 = sphi 0, %s32
      %s46 = sphi 0, %s48
      %s49 = sphi 0, %s46
      %s50 = sphi 0, %s49
      %s66 = sphi 0, %s50
      %s74 = sphi 0, %s76
      %s77 = sphi 0, %s74
      %s78 = sphi 0, %s77
      %s94 = sphi 0, %s78
      %s102 = sphi 0, %s104
      %s105 = sphi 0, %s102
      %s106 = sphi 0, %s105
      %s122 = sphi 0, %s106
    $region4: #{tpu_custom_call.1} parent=1 // loop_header_branch
      %25 = sbr.rel (%p23) target = $region8
    $region5: #{tpu_custom_call.1} parent=1 // loop_body
      %s27 = ssub.s32 %s22, 1
      %s28 = ssub.s32 %s22, 2
      %s35 = sadd.s32 1, %s30
      %p36 = scmp.ge.s32.totalorder %s35, 1
      %s37 = scalar_select %p36, 0, %s35
      %s38 = sadd.s32 1, %s29
      %s39 = scalar_select %p36, %s38, %s29
      %p40 = scmp.ge.s32.totalorder %s39, 6
      %s41 = scalar_select %p40, 0, %s39
      %s42 = ssub.s32 %s29, %s41
      %s43 = ssub.s32 %s30, %s37
      %s44 = sor.u32 %s42, %s43
      %p45 = scmp.eq.s32.totalorder %s44, 0
      %s47 = sadd.s32 %s46, 1
      %s48 = scalar_select %p45, %s46, %s47
      %p51 = pneg %p45
      %p52 = scmp.eq.s32.totalorder %s22, 5
      %p53 = por %p51, %p52
      %p54 = scmp.ne.s32.totalorder %s46, %s49
      %p55 = scmp.eq.s32.totalorder %s22, 0
      %p56 = por %p54, %p55
      %p57 = scmp.ne.s32.totalorder %s46, %s49
      %p58 = scmp.eq.s32.totalorder %s27, 5
      %p59 = por %p57, %p58
      %p60 = scmp.ne.s32.totalorder %s49, %s50
      %p61 = scmp.eq.s32.totalorder %s27, 0
      %p62 = por %p60, %p61
      %p63 = scmp.ne.s32.totalorder %s49, %s50
      %p64 = scmp.eq.s32.totalorder %s28, 5
      %p65 = por %p63, %p64
      %p67 = scmp.ne.s32.totalorder %s50, %s66
      %p68 = scmp.eq.s32.totalorder %s28, 0
      %p69 = por %p67, %p68
      %s70 = ssub.s32 %s29, %s41
      %s71 = ssub.s32 %s30, %s37
      %s72 = sor.u32 %s70, %s71
      %p73 = scmp.eq.s32.totalorder %s72, 0
      %s75 = sadd.s32 %s74, 1
      %s76 = scalar_select %p73, %s74, %s75
      %p79 = pneg %p73
      %p80 = scmp.eq.s32.totalorder %s22, 5
      %p81 = por %p79, %p80
      %p82 = scmp.ne.s32.totalorder %s74, %s77
      %p83 = scmp.eq.s32.totalorder %s22, 0
      %p84 = por %p82, %p83
      %p85 = scmp.ne.s32.totalorder %s74, %s77
      %p86 = scmp.eq.s32.totalorder %s27, 5
      %p87 = por %p85, %p86
      %p88 = scmp.ne.s32.totalorder %s77, %s78
      %p89 = scmp.eq.s32.totalorder %s27, 0
      %p90 = por %p88, %p89
      %p91 = scmp.ne.s32.totalorder %s77, %s78
      %p92 = scmp.eq.s32.totalorder %s28, 5
      %p93 = por %p91, %p92
      %p95 = scmp.ne.s32.totalorder %s78, %s94
      %p96 = scmp.eq.s32.totalorder %s28, 0
      %p97 = por %p95, %p96
      %s98 = ssub.s32 %s29, %s41
      %s99 = ssub.s32 %s30, %s37
      %s100 = sor.u32 %s98, %s99
      %p101 = scmp.eq.s32.totalorder %s100, 0
      %s103 = sadd.s32 %s102, 1
      %s104 = scalar_select %p101, %s102, %s103
      %p107 = pneg %p101
      %p108 = scmp.eq.s32.totalorder %s22, 5
      %p109 = por %p107, %p108
      %p110 = scmp.ne.s32.totalorder %s102, %s105
      %p111 = scmp.eq.s32.totalorder %s22, 0
      %p112 = por %p110, %p111
      %p113 = scmp.ne.s32.totalorder %s102, %s105
      %p114 = scmp.eq.s32.totalorder %s27, 5
      %p115 = por %p113, %p114
      %p116 = scmp.ne.s32.totalorder %s105, %s106
      %p117 = scmp.eq.s32.totalorder %s27, 0
      %p118 = por %p116, %p117
      %p119 = scmp.ne.s32.totalorder %s105, %s106
      %p120 = scmp.eq.s32.totalorder %s28, 5
      %p121 = por %p119, %p120
      %p123 = scmp.ne.s32.totalorder %s106, %s122
      %p124 = scmp.eq.s32.totalorder %s28, 0
      %p125 = por %p123, %p124
      %p126 = scmp.le.s32.totalorder 1, %s22
      %p127 = scmp.lt.s32.totalorder %s22, 7
      %p128 = pnand %p126, %p127
      %p129 = pneg %p128
      // Predicated region
      $region9: #{tpu_custom_call.1} parent=5 // pred_check
        _
      $region10: #{tpu_custom_call.1} parent=5 // pred_check_branch
        %131 = sbr.rel (%p128) target = $region12
      $region11: #{tpu_custom_call.1} parent=5 // pred_region
        %s132 = ssub.s32 %s22, 1
      $region12: #{tpu_custom_call.1} parent=5 // pred_fallthru
        _
      %p133 = scmp.lt.s32.totalorder %s22, 6
      // Predicated region
      $region13: #{tpu_custom_call.1} parent=5 // pred_check
        %p134 = pneg %p133
      $region14: #{tpu_custom_call.1} parent=5 // pred_check_branch
        %136 = sbr.rel (%p134) target = $region16
      $region15: #{tpu_custom_call.1} parent=5 // pred_region
        // Predicated region
        $region17: #{tpu_custom_call.1} parent=15 // pred_check
          %p137 = pneg %p56
        $region18: #{tpu_custom_call.1} parent=15 // pred_check_branch
          %139 = sbr.rel (%p137) target = $region20
        $region19: #{tpu_custom_call.1} parent=15 // pred_region
          %s140 = sand.u32 %s46, 1
          %s141 = scalar_lea.sflag [#allocation5], %s140
          %s142 = sand.u32 %s46, 1
          %s143 = smul.addr %s142, 4
          %s144 = scalar_lea.vmem [#allocation4], %s143
          %s146 = ssub.s32 64, 64
          %147 = vsyncadd %s141, %s146
          %s148 = sadd.s32 %s30, %s29
          %s149 = smul.addr %s148, 64
          %s150 = scalar_lea.hbm %s1, %s149
          %s152 = sshll.u32 %s144, 4
          %s153 = int_to_ptr.vmem [resolvable:$true] %s152
          %155 = dma.hbm_to_vmem [thread:$0]  %s150, 64, %s153, %s141
        $region20: #{tpu_custom_call.1} parent=15 // pred_fallthru
          _
        // Predicated region
        $region21: #{tpu_custom_call.1} parent=15 // pred_check
          %p156 = pneg %p84
        $region22: #{tpu_custom_call.1} parent=15 // pred_check_branch
          %158 = sbr.rel (%p156) target = $region24
        $region23: #{tpu_custom_call.1} parent=15 // pred_region
          %s159 = sand.u32 %s74, 1
          %s160 = scalar_lea.sflag [#allocation8], %s159
          %s161 = sand.u32 %s74, 1
          %s162 = smul.addr %s161, 4
          %s163 = scalar_lea.vmem [#allocation7], %s162
          %s165 = ssub.s32 64, 64
          %166 = vsyncadd %s160, %s165
          %s167 = sadd.s32 %s30, %s29
          %s168 = smul.addr %s167, 64
          %s169 = scalar_lea.hbm %s2, %s168
          %s171 = sshll.u32 %s163, 4
          %s172 = int_to_ptr.vmem [resolvable:$true] %s171
          %174 = dma.hbm_to_vmem [thread:$0]  %s169, 64, %s172, %s160
        $region24: #{tpu_custom_call.1} parent=15 // pred_fallthru
          _
      $region16: #{tpu_custom_call.1} parent=5 // pred_fallthru
        _
      %p175 = scmp.le.s32.totalorder 1, %s22
      %p176 = scmp.lt.s32.totalorder %s22, 7
      %p177 = pnand %p175, %p176
      %p178 = pneg %p177
      // Predicated region
      $region25: #{tpu_custom_call.1} parent=5 // pred_check
        _
      $region26: #{tpu_custom_call.1} parent=5 // pred_check_branch
        %180 = sbr.rel (%p177) target = $region28
      $region27: #{tpu_custom_call.1} parent=5 // pred_region
        %s181 = ssub.s32 %s22, 1
        %s182 = sand.u32 %s49, 1
        %s183 = scalar_lea.sflag [#allocation5], %s182
        %s184 = sand.u32 %s49, 1
        %s185 = smul.addr %s184, 4
        %s186 = scalar_lea.vmem [#allocation4], %s185
        // Predicated region
        $region29: #{tpu_custom_call.1} parent=27 // pred_check
          %p187 = pneg %p62
        $region30: #{tpu_custom_call.1} parent=27 // pred_check_branch
          %189 = sbr.rel (%p187) target = $region32
        $region31: #{tpu_custom_call.1} parent=27 // pred_region
          %190 = dma.done %s183, 64
        $region32: #{tpu_custom_call.1} parent=27 // pred_fallthru
          _
        %s191 = sand.u32 %s77, 1
        %s192 = scalar_lea.sflag [#allocation8], %s191
        %s193 = sand.u32 %s77, 1
        %s194 = smul.addr %s193, 4
        %s195 = scalar_lea.vmem [#allocation7], %s194
        // Predicated region
        $region33: #{tpu_custom_call.1} parent=27 // pred_check
          %p196 = pneg %p90
        $region34: #{tpu_custom_call.1} parent=27 // pred_check_branch
          %198 = sbr.rel (%p196) target = $region36
        $region35: #{tpu_custom_call.1} parent=27 // pred_region
          %199 = dma.done %s192, 64
        $region36: #{tpu_custom_call.1} parent=27 // pred_fallthru
          _
        %s200 = sand.u32 %s49, 1
        %s201 = scalar_lea.sflag [#allocation5], %s200
        %s202 = sand.u32 %s49, 1
        %s203 = smul.addr %s202, 4
        %s204 = scalar_lea.vmem [#allocation4], %s203
        %p205 = pneg %p62
        %p206 = pneg %p59
        %s207 = sand.u32 %s77, 1
        %s208 = scalar_lea.sflag [#allocation8], %s207
        %s209 = sand.u32 %s77, 1
        %s210 = smul.addr %s209, 4
        %s211 = scalar_lea.vmem [#allocation7], %s210
        %p212 = pneg %p90
        %p213 = pneg %p87
        %p214 = pneg %p118
        %p215 = pneg %p115
        %s216 = sand.u32 %s105, 1
        %s217 = scalar_lea.sflag [#allocation6], %s216
        %s218 = sand.u32 %s105, 1
        %s219 = smul.addr %s218, 4
        %s220 = scalar_lea.vmem [#allocation9], %s219
        %s221 = sld [smem:[#allocation3 + %s31]]
        %v222 = vld [vmem:[%s195] sm:$0xf]
        %v223 = vld [vmem:[%s186] sm:$0xf]
        %v224 = vstv %s221
        %v225 = vmul.f32 %v224, %v223
        %v226 = vadd.f32 %v225, %v222
        %vm227 = vcmask 125952
        %228 = vst.msk [vmem:[%s220] sm:$0xf] %vm227, %v226
        %v229 = vld [vmem:[%s186] sm:$0xf]
        %v230 = vmul.f32 %v224, %v229
        %232 = vrot.lane.b32.xlu0 %v222, 16
        %v233 = vpop.permute.xlu0 %232
        %v235 = vadd.f32 %v230, %v233
        %vm236 = vcmask 257152
        %237 = vst.msk [vmem:[%s220] sm:$0xf] %vm236, %v235
        %v238 = vld [vmem:[%s186] sm:$0xf]
        %v239 = vmul.f32 %v224, %v238
        %240 = vrot.lane.b32.xlu0 %v222, 32
        %v241 = vpop.permute.xlu0 %240
        %v243 = vadd.f32 %v239, %v241
        %vm244 = vcmask 388352
        %245 = vst.msk [vmem:[%s220] sm:$0xf] %vm244, %v243
        %v246 = vld [vmem:[%s186] sm:$0xf]
        %v247 = vmul.f32 %v224, %v246
        %248 = vrot.lane.b32.xlu0 %v222, 48
        %v249 = vpop.permute.xlu0 %248
        %v251 = vadd.f32 %v247, %v249
        %vm252 = vcmask 519552
        %253 = vst.msk [vmem:[%s220] sm:$0xf] %vm252, %v251
        %s254 = sand.u32 %s105, 1
        %s255 = scalar_lea.sflag [#allocation6], %s254
        %s256 = sand.u32 %s105, 1
        %s257 = smul.addr %s256, 4
        %s258 = scalar_lea.vmem [#allocation9], %s257
        // Predicated region
        $region37: #{tpu_custom_call.1} parent=27 // pred_check
          %p259 = pneg %p115
        $region38: #{tpu_custom_call.1} parent=27 // pred_check_branch
          %261 = sbr.rel (%p259) target = $region40
        $region39: #{tpu_custom_call.1} parent=27 // pred_region
          %s263 = ssub.s32 64, 64
          %264 = vsyncadd %s255, %s263
          %s265 = sadd.s32 %s32, %s31
          %s266 = smul.addr %s265, 64
          %s267 = scalar_lea.hbm %s3, %s266
          %s269 = sshll.u32 %s258, 4
          %s270 = int_to_ptr.vmem [resolvable:$true] %s269
          %272 = dma.vmem_to_hbm [thread:$0]  %s270, 64, %s267, %s255
        $region40: #{tpu_custom_call.1} parent=27 // pred_fallthru
          _
      $region28: #{tpu_custom_call.1} parent=5 // pred_fallthru
        _
      %p273 = scmp.le.s32.totalorder 2, %s22
      // Predicated region
      $region41: #{tpu_custom_call.1} parent=5 // pred_check
        %p274 = pneg %p273
      $region42: #{tpu_custom_call.1} parent=5 // pred_check_branch
        %276 = sbr.rel (%p274) target = $region44
      $region43: #{tpu_custom_call.1} parent=5 // pred_region
        %s277 = ssub.s32 %s22, 2
        // Predicated region
        $region45: #{tpu_custom_call.1} parent=43 // pred_check
          %p278 = pneg %p121
        $region46: #{tpu_custom_call.1} parent=43 // pred_check_branch
          %280 = sbr.rel (%p278) target = $region48
        $region47: #{tpu_custom_call.1} parent=43 // pred_region
          %s281 = sand.u32 %s106, 1
          %s282 = scalar_lea.sflag [#allocation6], %s281
          %s283 = sand.u32 %s106, 1
          %s284 = smul.addr %s283, 4
          %s285 = scalar_lea.vmem [#allocation9], %s284
          %286 = dma.done %s282, 64
        $region48: #{tpu_custom_call.1} parent=43 // pred_fallthru
          _
      $region44: #{tpu_custom_call.1} parent=5 // pred_fallthru
        _
    $region6: #{tpu_custom_call.1} parent=1 // loop_footer
      %s26 = sadd.s32 1, %s22
    $region7: #{tpu_custom_call.1} parent=1 // loop_footer_branch
      %21 = sbr.rel target = $region3
    $region8: #{tpu_custom_call.1} parent=1 // loop_exit
      _
    %287 = vsyncpa [#allocation5], 1
    %s288 = scalar_lea.sflag [#allocation5], 1
    %289 = vsyncpa %s288, 1
    %290 = vsyncpa [#allocation8], 1
    %s291 = scalar_lea.sflag [#allocation8], 1
    %292 = vsyncpa %s291, 1
    %293 = vsyncpa [#allocation6], 1
    %s294 = scalar_lea.sflag [#allocation6], 1
    %295 = vsyncpa %s294, 1

</llo_original>
